<compile_context>
chip_gen: v7x
topology: tpu7x:2x2x1
jax: 0.10.0
libtpu: 0.0.40
codegen_flags: <defaults>
</compile_context>

<pallas_src>
import jax
import jax.numpy as jnp
from jax.experimental import pallas as pl
from jax.experimental.pallas import tpu as pltpu


_LANE = 128
_SUBLANE = 8
_COL_CAP = 3584                        # lane-block cap (multiple of 128)
_TILE_BUDGET_BYTES = 4 * 1024 * 1024   # combined (input + output) bytes per tile


def _round_down(x, m):
    return (x // m) * m


def _round_up(x, m):
    return ((x + m - 1) // m) * m


def _sublane_unit(dtype):
    # Native sublane packing: f32 -> 8 rows / tile, bf16/f16 -> 16, int8/uint8 -> 32.
    itemsize = jnp.dtype(dtype).itemsize
    return _SUBLANE * max(1, 4 // itemsize)


def _normalize_kernel(scale_ref, img_ref, out_ref):
    # scale_ref: (block_rows, 2) f32; [:, 0] = mul, [:, 1] = sub  (row = n*C + c)
    # img_ref:   (block_rows, block_cols) in the input's native dtype
    # out_ref:   same block in the output dtype; the store performs the final cast.
    x = img_ref[...].astype(jnp.float32)
    mul = scale_ref[:, 0:1]
    sub = scale_ref[:, 1:2]
    out_ref[...] = (x * mul - sub).astype(out_ref.dtype)


def normalize_input(img, mean, std, output_cast=None, half_dtype=jnp.bfloat16):
    """Pallas implementation of NormalizeInputModel.forward.

    img:  (N, C, H, W), any float or integer dtype (read natively, cast in-kernel)
    mean: (C,) list / array
    std:  (C,) list / array
    output_cast: None | 'full' | 'half'
    half_dtype:  dtype used for output_cast='half'.  Defaults to bfloat16 (TPU-native,
                 halves HBM write traffic); pass jnp.float16 for bit-level parity with
                 PyTorch .half().
    """
    N, C, H, W = img.shape
    rows, cols = N * C, H * W

    mean = jnp.asarray(mean, jnp.float32)
    std = jnp.asarray(std, jnp.float32)
    mul = 1.0 / (255.0 * std)          # (C,)
    sub = mean / std                   # (C,)

    if output_cast == "full":
        out_dtype = jnp.float32
    elif output_cast == "half":
        out_dtype = jnp.dtype(half_dtype)
    else:
        # Match torch promotion (float32 params): integer / half inputs promote to f32.
        out_dtype = jnp.promote_types(img.dtype, jnp.float32)

    # Per-row (row = n*C + c) scale/shift packed into one (rows, 2) f32 array.
    scale = jnp.stack([jnp.tile(mul, N), jnp.tile(sub, N)], axis=-1)

    # Lane-dense 2D view: H*W becomes the lane (last) axis.
    img2d = img.reshape(rows, cols)
    in_itemsize = img2d.dtype.itemsize
    out_itemsize = jnp.dtype(out_dtype).itemsize

    # ---- Column (lane) block: fixed 128-multiple; cdiv grid masks only the ragged
    # trailing block instead of degrading every store to a masked partial store.
    if cols < _LANE:
        block_cols = cols
    else:
        block_cols = min(_round_down(cols, _LANE), _COL_CAP)

    # ---- Row (sublane) block: dtype-aware budget over (in + out) bytes, aligned to
    # the native packed-sublane tile of the widest-packing dtype involved.
    row_unit = max(_sublane_unit(img2d.dtype), _sublane_unit(out_dtype))
    per_row_bytes = block_cols * (in_itemsize + out_itemsize)
    target_rows = max(row_unit, _TILE_BUDGET_BYTES // per_row_bytes)
    if rows <= row_unit:
        block_rows = rows
    else:
        block_rows = min(rows, _round_down(target_rows, row_unit))

    grid_rows = pl.cdiv(rows, block_rows)
    grid_cols = pl.cdiv(cols, block_cols)

    # v7x reaches its HBM bandwidth only with both TensorCores streaming: make sure
    # at least one "parallel" axis has >= 2 steps whenever the row axis allows it.
    if grid_rows * grid_cols < 2 and rows >= 2 * row_unit:
        block_rows = min(rows, _round_up(pl.cdiv(rows, 2), row_unit))
        grid_rows = pl.cdiv(rows, block_rows)

    grid = (grid_rows, grid_cols)

    in_bytes = rows * cols * in_itemsize
    out_bytes = rows * cols * out_itemsize

    out2d = pl.pallas_call(
        _normalize_kernel,
        out_shape=jax.ShapeDtypeStruct((rows, cols), out_dtype),
        grid=grid,
        in_specs=[
            pl.BlockSpec((block_rows, 2), lambda r, c: (r, 0)),           # packed mul/sub
            pl.BlockSpec((block_rows, block_cols), lambda r, c: (r, c)),  # image tile
        ],
        out_specs=pl.BlockSpec((block_rows, block_cols), lambda r, c: (r, c)),
        compiler_params=pltpu.CompilerParams(
            dimension_semantics=("parallel", "parallel"),
            # ~4 MiB combined tiles, double buffered (~8-9 MiB) -- well inside the
            # scoped defaults, but give explicit headroom (safe on v5e/v6e/v7x).
            vmem_limit_bytes=32 * 1024 * 1024,
        ),
        cost_estimate=pl.CostEstimate(
            flops=2 * rows * cols,
            transcendentals=0,
            bytes_accessed=in_bytes + out_bytes + rows * 2 * 4,
        ),
    )(scale, img2d)

    # TODO(synk): the wrapped `self.model` is an arbitrary sub-module and is treated
    # as identity here; the dominant structural optimization is to fold this affine
    # into the first conv's weights/bias so this standalone HBM round trip disappears.
    return out2d.reshape(N, C, H, W)


def _reference(img, mean, std, output_cast=None, half_dtype=jnp.bfloat16):
    mean = jnp.asarray(mean, jnp.float32)
    std = jnp.asarray(std, jnp.float32)
    mul = (1.0 / (255.0 * std)).reshape(-1, 1, 1)
    sub = (mean / std).reshape(-1, 1, 1)
    y = img.astype(jnp.float32) * mul - sub
    if output_cast == "full":
        return y.astype(jnp.float32)
    if output_cast == "half":
        return y.astype(half_dtype)
    return y.astype(jnp.promote_types(img.dtype, jnp.float32))


if __name__ == "__main__":
    key = jax.random.PRNGKey(0)
    N, C, H, W = 2, 4, 16, 16

    # Synthetic "image" in [0, 255], float32 (as if already converted from uint8).
    img = jax.random.uniform(key, (N, C, H, W), dtype=jnp.float32) * 255.0

    # Deterministic normalization parameters (ImageNet-like, length C=4).
    mean = [123.675, 116.28, 103.53, 110.0]
    std = [58.395, 57.12, 57.375, 57.0]

    # output_cast='full': f32 in -> f32 out.
    out_full = jax.block_until_ready(normalize_input(img, mean, std, "full"))
    ref_full = _reference(img, mean, std, "full")
    assert out_full.shape == (N, C, H, W) and out_full.dtype == jnp.float32
    assert jnp.allclose(out_full, ref_full, atol=1e-5, rtol=1e-5)

    # output_cast='half': compute in f32, downcast on the store (bf16 TPU-native default).
    out_half = jax.block_until_ready(normalize_input(img, mean, std, "half"))
    ref_half = _reference(img, mean, std, "half")
    assert out_half.dtype == jnp.bfloat16
    assert jnp.allclose(out_half.astype(jnp.float32),
                        ref_half.astype(jnp.float32), atol=2e-2, rtol=2e-2)

    # output_cast=None with integer input: in-kernel upcast, promote to f32.
    img_u8 = (jax.random.uniform(jax.random.PRNGKey(1), (N, C, H, W)) * 255.0).astype(jnp.uint8)
    out_u8 = jax.block_until_ready(normalize_input(img_u8, mean, std, None))
    ref_u8 = _reference(img_u8, mean, std, None)
    assert out_u8.dtype == jnp.float32
    assert jnp.allclose(out_u8, ref_u8, atol=1e-5, rtol=1e-5)

    # Ragged H*W (13*17 = 221, not a multiple of 128): exercises the cdiv grid with a
    # masked trailing column block.
    img_rag = jax.random.uniform(jax.random.PRNGKey(2), (2, 3, 13, 17), dtype=jnp.float32) * 255.0
    out_rag = jax.block_until_ready(normalize_input(img_rag, mean[:3], std[:3], "full"))
    ref_rag = _reference(img_rag, mean[:3], std[:3], "full")
    assert out_rag.shape == (2, 3, 13, 17)
    assert jnp.allclose(out_rag, ref_rag, atol=1e-5, rtol=1e-5)

    print("KERNEL_OK")
</pallas_src>

<mosaic_0001>
module attributes {stable_mosaic.version = 11 : i64} {
  func.func @_normalize_kernel(%arg0: i32, %arg1: i32, %arg2: memref<8x2xf32, #tpu.memory_space<vmem>>, %arg3: memref<8x256xf32, #tpu.memory_space<vmem>>, %arg4: memref<8x256xf32, #tpu.memory_space<vmem>>) attributes {dimension_semantics = [#tpu.dimension_semantics<parallel>, #tpu.dimension_semantics<parallel>], iteration_bounds = array<i64: 1, 1>, scalar_prefetch = 0 : i64, scratch_operands = 0 : i64, tpu.core_type = #tpu.core_type<tc>, window_params = [{transform_indices = @transform_0, window_bounds = array<i64: 8, 2>}, {transform_indices = @transform_1, window_bounds = array<i64: 8, 256>}, {transform_indices = @transform_2, window_bounds = array<i64: 8, 256>}]} {
    %c0 = arith.constant 0 : index
    %c0_0 = arith.constant 0 : index
    %0 = vector.load %arg3[%c0, %c0_0] : memref<8x256xf32, #tpu.memory_space<vmem>>, vector<8x256xf32>
    %c0_1 = arith.constant 0 : index
    %c0_2 = arith.constant 0 : index
    %1 = vector.load %arg2[%c0_1, %c0_2] : memref<8x2xf32, #tpu.memory_space<vmem>>, vector<8x1xf32>
    %c0_3 = arith.constant 0 : index
    %c1 = arith.constant 1 : index
    %2 = vector.load %arg2[%c0_3, %c1] : memref<8x2xf32, #tpu.memory_space<vmem>>, vector<8x1xf32>
    %3 = vector.broadcast %1 : vector<8x1xf32> to vector<8x256xf32>
    %4 = arith.mulf %0, %3 : vector<8x256xf32>
    %5 = vector.broadcast %2 : vector<8x1xf32> to vector<8x256xf32>
    %6 = arith.subf %4, %5 : vector<8x256xf32>
    %c0_4 = arith.constant 0 : index
    %c0_5 = arith.constant 0 : index
    %7 = vector.load %arg4[%c0_4, %c0_5] : memref<8x256xf32, #tpu.memory_space<vmem>>, vector<8x256xf32>
    tpu.vector_store %arg4[%c0_4, %c0_5], %6 {strides = array<i32>} : memref<8x256xf32, #tpu.memory_space<vmem>>, vector<8x256xf32>,
    return
  }
  func.func @transform_0(%arg0: i32, %arg1: i32) -> (i32, i32) {
    %c0_i32 = arith.constant 0 : i32
    %c0_i32_0 = arith.constant 0 : i32
    return %arg0, %c0_i32 : i32, i32
  }
  func.func @transform_1(%arg0: i32, %arg1: i32) -> (i32, i32) {
    %c0_i32 = arith.constant 0 : i32
    return %arg0, %arg1 : i32, i32
  }
  func.func @transform_2(%arg0: i32, %arg1: i32) -> (i32, i32) {
    %c0_i32 = arith.constant 0 : i32
    return %arg0, %arg1 : i32, i32
  }
}

</mosaic_0001>

<llo_original>
// kernel: tpu_custom_call.1
$region0: #{tpu_custom_call.1}
  #allocation0 [shape = 'u32[]', space=smem, size = 0x4, offset = 0x4, fixed_abs, tag = 'smem constant byte address 0x4 - core index']
  #allocation1 [shape = 'u32[144,128]{1,0:T(1,128)}', space=vmem, size = 0x12000, scoped, tag = 'internal scratch']
  %s0 = inlined_call_operand.vmem [shape: f32[8,2], index: 0, kind: input, shape index: {}]
  %s1 = inlined_call_operand.hbm [shape: f32[8,256], index: 1, kind: input, shape index: {}]
  %s2 = inlined_call_operand.hbm [shape: f32[8,256], index: 2, kind: output, shape index: {}]
  %s3 = sld [smem:[#allocation0]]
  $region22: #{tpu_custom_call.1} parent=0
    _
  %s5 = ssub.s32 1, %s3
  %s6 = scalar_select 0, %s5, %s3
  $region1: #{tpu_custom_call.1} parent=0
    #allocation2 [shape = 'u8[8192]{0}', space=vmem, size = 0x2000, scoped, tag = 'input window, operand 1, single buffered']
    #allocation3 [shape = 's32[1]{0}', space=sflag, size = 0x4, scoped, tag = 'scoped memory for tpu_custom_call.1']
    #allocation4 [shape = 's32[1]{0}', space=sflag, size = 0x4, scoped, tag = 'scoped memory for tpu_custom_call.1']
    #allocation5 [shape = 'u8[8192]{0}', space=vmem, size = 0x2000, scoped, tag = 'output window, operand 0, single buffered']
    %7 = vsyncpa [#allocation3], 0
    %8 = vsyncpa [#allocation4], 0
    // Predicated region
    $region2: #{tpu_custom_call.1} parent=1 // pred_check
      _
    $region3: #{tpu_custom_call.1} parent=1 // pred_check_branch
      %10 = sbr.rel (0) target = $region5
    $region4: #{tpu_custom_call.1} parent=1 // pred_region
      _
    $region5: #{tpu_custom_call.1} parent=1 // pred_fallthru
      _
    // Predicated region
    $region6: #{tpu_custom_call.1} parent=1 // pred_check
      _
    $region7: #{tpu_custom_call.1} parent=1 // pred_check_branch
      %12 = sbr.rel (0) target = $region9
    $region8: #{tpu_custom_call.1} parent=1 // pred_region
      %s14 = ssub.s32 256, 256
      %15 = vsyncadd [#allocation3], %s14
      %s17 = sshll.u32 [#allocation2], 4
      %s18 = int_to_ptr.vmem [resolvable:$true] %s17
      %20 = dma.hbm_to_vmem [thread:$0]  %s1, 256, %s18, [#allocation3]
    $region9: #{tpu_custom_call.1} parent=1 // pred_fallthru
      _
    // Predicated region
    $region10: #{tpu_custom_call.1} parent=1 // pred_check
      _
    $region11: #{tpu_custom_call.1} parent=1 // pred_check_branch
      %22 = sbr.rel (0) target = $region13
    $region12: #{tpu_custom_call.1} parent=1 // pred_region
      %23 = dma.done [#allocation3], 256
    $region13: #{tpu_custom_call.1} parent=1 // pred_fallthru
      _
    %v24 = vld [vmem:[#allocation2] sm:$0xff]
    %v25 = vld [vmem:[#allocation2 + $0x8] sm:$0xff]
    %v26 = vld [vmem:[%s0] sm:$0xff]
    %28 = vset.pattern.permute.xlu0 0
    %29 = vperm.xlu0 %28, %v26
    %v30 = vpop.permute.xlu0 %29
    %v32 = vmul.f32 %v24, %v30
    %v33 = vmul.f32 %v25, %v30
    %34 = vset.pattern.permute.xlu0 1
    %35 = vperm.xlu0 %34, %v26
    %v36 = vpop.permute.xlu0 %35
    %v38 = vsub.f32 %v32, %v36
    %v39 = vsub.f32 %v33, %v36
    %40 = vst [vmem:[#allocation5] sm:$0xff] %v38
    %41 = vst [vmem:[#allocation5 + $0x8] sm:$0xff] %v39
    // Predicated region
    $region14: #{tpu_custom_call.1} parent=1 // pred_check
      _
    $region15: #{tpu_custom_call.1} parent=1 // pred_check_branch
      %43 = sbr.rel (0) target = $region17
    $region16: #{tpu_custom_call.1} parent=1 // pred_region
      %s45 = ssub.s32 256, 256
      %46 = vsyncadd [#allocation4], %s45
      %s48 = sshll.u32 [#allocation5], 4
      %s49 = int_to_ptr.vmem [resolvable:$true] %s48
      %51 = dma.vmem_to_hbm [thread:$0]  %s49, 256, %s2, [#allocation4]
    $region17: #{tpu_custom_call.1} parent=1 // pred_fallthru
      _
    // Predicated region
    $region18: #{tpu_custom_call.1} parent=1 // pred_check
      _
    $region19: #{tpu_custom_call.1} parent=1 // pred_check_branch
      %53 = sbr.rel (0) target = $region21
    $region20: #{tpu_custom_call.1} parent=1 // pred_region
      %54 = dma.done [#allocation4], 256
    $region21: #{tpu_custom_call.1} parent=1 // pred_fallthru
      _
    %55 = vsyncpa [#allocation3], 1
    %56 = vsyncpa [#allocation4], 1

</llo_original>
